<compile_context>
chip_gen: v7x
topology: tpu7x:2x2x1
jax: 0.10.0
libtpu: 0.0.40
codegen_flags: <defaults>
</compile_context>

<pallas_src>
import functools

import jax
import jax.numpy as jnp
from jax.experimental import pallas as pl
from jax.experimental.pallas import tpu as pltpu

GAMMA = 2.0  # module default


def _round_up(v, m):
    return ((v + m - 1) // m) * m


def _focal_kernel(x_ref, lbl_ref, out_ref, *, gamma, n_rows, block_rows):
    """One row tile: partial sum of focal * log_softmax at the target class.

    x_ref:   (R, C) logits block (native dtype, cast to f32 here).
    lbl_ref: (R, 1) int32 target-class index per row.
    out_ref: (8, 128) f32 block filled with this tile's partial sum.
    """
    x = x_ref[...].astype(jnp.float32)                    # (R, C)
    lbl = lbl_ref[...]                                     # (R, 1) int32
    r, c = x.shape

    # --- numerically stable log-sum-exp (single full-width exp) ----------
    m = jnp.max(x, axis=-1, keepdims=True)
    shifted = x - m                                        # <= 0 for valid rows
    lse = jnp.log(jnp.sum(jnp.exp(shifted), axis=-1, keepdims=True))

    # --- gather shifted logit at the target column (one iota, one select) -
    col = jax.lax.broadcasted_iota(jnp.int32, (r, c), 1)
    picked = jnp.sum(jnp.where(col == lbl, shifted, 0.0),
                     axis=-1, keepdims=True)               # (R, 1)

    # --- focal term: O(N) work only ---------------------------------------
    log_p_t = picked - lse                                 # log_softmax[i, t_i]
    p_t = jnp.exp(log_p_t)
    omp = 1.0 - p_t
    if gamma == 2.0:
        focal = omp * omp                                  # explicit square
    else:
        focal = omp ** gamma

    # --- mask tail rows of the last block, reduce to a tile partial sum ---
    row = (pl.program_id(0) * block_rows
           + jax.lax.broadcasted_iota(jnp.int32, (r, 1), 0))
    vals = jnp.where(row < n_rows, focal * log_p_t, 0.0)   # (R, 1)
    partial = jnp.sum(vals, axis=0, keepdims=True)         # (1, 1)
    out_ref[...] = jnp.broadcast_to(partial, out_ref.shape)


def softmax_focal_loss(x, target, gamma=GAMMA):
    """Forward pass of SoftmaxFocalLoss. x: (N, C) logits, target: (N, C)."""
    n, c = x.shape

    # Target argmax once in the wrapper; only (N, 1) int32 labels enter the
    # kernel (first-max semantics, matching common torch behavior).
    labels = jnp.argmax(target, axis=1).astype(jnp.int32).reshape(n, 1)

    # --- row-tile sizing: temporaries-aware VMEM budget (v7x-safe) --------
    x_bytes = jnp.dtype(x.dtype).itemsize
    # 2 pipeline buffers of the input block + ~5 full-width f32 temporaries.
    per_row_bytes = 2 * c * x_bytes + 20 * c + 16
    budget = 32 * 1024 * 1024                    # total VMEM footprint target
    block_rows = max(8, min(4096, (budget // per_row_bytes) // 8 * 8))
    block_rows = min(block_rows, _round_up(n, 8))
    if n > 8:  # ensure >= 2 grid steps so both v7x TensorCores get work
        block_rows = min(block_rows, _round_up(pl.cdiv(n, 2), 8))
    grid = pl.cdiv(n, block_rows)
    # TODO(synk): for extremely large C (rows that don't fit VMEM even at 8
    # rows) a C-tiled / online-LSE two-pass kernel would be needed.

    kernel = functools.partial(_focal_kernel, gamma=float(gamma),
                               n_rows=n, block_rows=block_rows)

    partials = pl.pallas_call(
        kernel,
        out_shape=jax.ShapeDtypeStruct((8, grid * 128), jnp.float32),
        grid=(grid,),
        in_specs=[
            pl.BlockSpec((block_rows, c), lambda i: (i, 0)),   # logits (native dtype)
            pl.BlockSpec((block_rows, 1), lambda i: (i, 0)),   # int32 labels
        ],
        out_specs=pl.BlockSpec((8, 128), lambda i: (0, i)),    # lane-dense partial
        compiler_params=pltpu.CompilerParams(
            dimension_semantics=("parallel",),
            vmem_limit_bytes=48 * 1024 * 1024,
        ),
        cost_estimate=pl.CostEstimate(
            flops=8 * n * c,
            transcendentals=n * c,
            bytes_accessed=n * c * x_bytes + n * 4 + grid * 8 * 128 * 4,
        ),
    )(x, labels)

    # Each (8, 128) block holds one replicated tile partial; pick one lane each.
    total = jnp.sum(partials[0, ::128])
    return -total / jnp.float32(n)


def _reference(x, target, gamma=GAMMA):
    # pure-JAX reference mirroring the PyTorch module
    log_prob = jax.nn.log_softmax(x, axis=-1)
    prob = jnp.exp(log_prob)
    focal = (1.0 - prob) ** gamma * log_prob
    t = jnp.argmax(target, axis=1)
    picked = jnp.take_along_axis(focal, t[:, None], axis=1)[:, 0]
    return -jnp.mean(picked)


if __name__ == "__main__":
    key = jax.random.PRNGKey(0)
    k1, k2, k3, k4 = jax.random.split(key, 4)

    # Main small case.
    N, C = 8, 32
    x = jax.random.normal(k1, (N, C), dtype=jnp.float32)
    labels = jax.random.randint(k2, (N,), 0, C)
    target = jax.nn.one_hot(labels, C, dtype=jnp.float32)
    loss = jax.block_until_ready(softmax_focal_loss(x, target))
    ref = _reference(x, target)
    assert jnp.allclose(loss, ref, atol=1e-5, rtol=1e-5), (loss, ref)

    # Unaligned case: exercises tail-row masking, non-128 class axis, grid=2.
    N2, C2 = 37, 23
    x2 = jax.random.normal(k3, (N2, C2), dtype=jnp.float32)
    labels2 = jax.random.randint(k4, (N2,), 0, C2)
    target2 = jax.nn.one_hot(labels2, C2, dtype=jnp.float32)
    loss2 = jax.block_until_ready(softmax_focal_loss(x2, target2))
    ref2 = _reference(x2, target2)
    assert jnp.allclose(loss2, ref2, atol=1e-5, rtol=1e-5), (loss2, ref2)

    print("KERNEL_OK")
</pallas_src>

<mosaic_0001>
module attributes {stable_mosaic.version = 11 : i64} {
  func.func @_focal_kernel(%arg0: i32, %arg1: memref<8x32xf32, #tpu.memory_space<vmem>>, %arg2: memref<8x1xi32, #tpu.memory_space<vmem>>, %arg3: memref<8x128xf32, #tpu.memory_space<vmem>>) attributes {dimension_semantics = [#tpu.dimension_semantics<parallel>], iteration_bounds = array<i64: 1>, scalar_prefetch = 0 : i64, scratch_operands = 0 : i64, tpu.core_type = #tpu.core_type<tc>, window_params = [{transform_indices = @transform_0, window_bounds = array<i64: 8, 32>}, {transform_indices = @transform_1, window_bounds = array<i64: 8, 1>}, {transform_indices = @transform_2, window_bounds = array<i64: 8, 128>}]} {
    %c0 = arith.constant 0 : index
    %c0_0 = arith.constant 0 : index
    %0 = vector.load %arg1[%c0, %c0_0] : memref<8x32xf32, #tpu.memory_space<vmem>>, vector<8x32xf32>
    %c0_1 = arith.constant 0 : index
    %c0_2 = arith.constant 0 : index
    %1 = vector.load %arg2[%c0_1, %c0_2] : memref<8x1xi32, #tpu.memory_space<vmem>>, vector<8x1xi32>
    %cst = arith.constant dense<0xFF800000> : vector<8xf32>
    %2 = vector.multi_reduction <maximumf>, %0, %cst [1] : vector<8x32xf32> to vector<8xf32>
    %3 = vector.shape_cast %2 : vector<8xf32> to vector<8x1xf32>
    %4 = vector.broadcast %3 : vector<8x1xf32> to vector<8x32xf32>
    %5 = arith.subf %0, %4 : vector<8x32xf32>
    %6 = math.exp %5 : vector<8x32xf32>
    %cst_3 = arith.constant dense<0.000000e+00> : vector<8xf32>
    %7 = vector.multi_reduction <add>, %6, %cst_3 [1] : vector<8x32xf32> to vector<8xf32>
    %8 = vector.shape_cast %7 : vector<8xf32> to vector<8x1xf32>
    %9 = math.log %8 : vector<8x1xf32>
    %10 = tpu.iota {dimensions = array<i32: 1>} : vector<8x32xi32>
    %11 = vector.broadcast %1 : vector<8x1xi32> to vector<8x32xi32>
    %12 = arith.cmpi eq, %10, %11 : vector<8x32xi32>
    %cst_4 = arith.constant 0.000000e+00 : f32
    %13 = vector.broadcast %cst_4 : f32 to vector<8x32xf32>
    %14 = arith.select %12, %5, %13 : vector<8x32xi1>, vector<8x32xf32>
    %cst_5 = arith.constant dense<0.000000e+00> : vector<8xf32>
    %15 = vector.multi_reduction <add>, %14, %cst_5 [1] : vector<8x32xf32> to vector<8xf32>
    %16 = vector.shape_cast %15 : vector<8xf32> to vector<8x1xf32>
    %17 = arith.subf %16, %9 : vector<8x1xf32>
    %18 = math.exp %17 : vector<8x1xf32>
    %cst_6 = arith.constant 1.000000e+00 : f32
    %19 = vector.broadcast %cst_6 : f32 to vector<8x1xf32>
    %20 = arith.subf %19, %18 : vector<8x1xf32>
    %21 = arith.mulf %20, %20 : vector<8x1xf32>
    %c8_i32 = arith.constant 8 : i32
    %22 = arith.muli %arg0, %c8_i32 : i32
    %23 = tpu.iota {dimensions = array<i32: 0>} : vector<8x1xi32>
    %24 = vector.broadcast %22 : i32 to vector<8x1xi32>
    %25 = arith.addi %24, %23 : vector<8x1xi32>
    %c8_i32_7 = arith.constant 8 : i32
    %26 = vector.broadcast %c8_i32_7 : i32 to vector<8x1xi32>
    %27 = arith.cmpi slt, %25, %26 : vector<8x1xi32>
    %28 = arith.mulf %21, %17 : vector<8x1xf32>
    %cst_8 = arith.constant 0.000000e+00 : f32
    %29 = vector.broadcast %cst_8 : f32 to vector<8x1xf32>
    %30 = arith.select %27, %28, %29 : vector<8x1xi1>, vector<8x1xf32>
    %cst_9 = arith.constant dense<0.000000e+00> : vector<1xf32>
    %31 = vector.multi_reduction <add>, %30, %cst_9 [0] : vector<8x1xf32> to vector<1xf32>
    %32 = vector.shape_cast %31 : vector<1xf32> to vector<1x1xf32>
    %33 = vector.shape_cast %32 : vector<1x1xf32> to vector<1x1xf32>
    %34 = vector.broadcast %33 : vector<1x1xf32> to vector<8x128xf32>
    %c0_10 = arith.constant 0 : index
    %c0_11 = arith.constant 0 : index
    %35 = vector.load %arg3[%c0_10, %c0_11] : memref<8x128xf32, #tpu.memory_space<vmem>>, vector<8x128xf32>
    tpu.vector_store %arg3[%c0_10, %c0_11], %34 {strides = array<i32>} : memref<8x128xf32, #tpu.memory_space<vmem>>, vector<8x128xf32>,
    return
  }
  func.func @transform_0(%arg0: i32) -> (i32, i32) {
    %c0_i32 = arith.constant 0 : i32
    %c0_i32_0 = arith.constant 0 : i32
    return %arg0, %c0_i32 : i32, i32
  }
  func.func @transform_1(%arg0: i32) -> (i32, i32) {
    %c0_i32 = arith.constant 0 : i32
    %c0_i32_0 = arith.constant 0 : i32
    return %arg0, %c0_i32 : i32, i32
  }
  func.func @transform_2(%arg0: i32) -> (i32, i32) {
    %c0_i32 = arith.constant 0 : i32
    %c0_i32_0 = arith.constant 0 : i32
    return %c0_i32, %arg0 : i32, i32
  }
}

</mosaic_0001>

<llo_original>
// kernel: tpu_custom_call.1
$region0: #{tpu_custom_call.1}
  #allocation0 [shape = 'u32[]', space=smem, size = 0x4, offset = 0x4, fixed_abs, tag = 'smem constant byte address 0x4 - core index']
  #allocation1 [shape = 'u32[144,128]{1,0:T(1,128)}', space=vmem, size = 0x12000, scoped, tag = 'internal scratch']
  %s0 = inlined_call_operand.vmem [shape: f32[8,32], index: 0, kind: input, shape index: {}]
  %s1 = inlined_call_operand.vmem [shape: s32[8,1], index: 1, kind: input, shape index: {}]
  %s2 = inlined_call_operand.hbm [shape: f32[8,128], index: 2, kind: output, shape index: {}]
  %s3 = sld [smem:[#allocation0]]
  $region18: #{tpu_custom_call.1} parent=0
    _
  %s5 = ssub.s32 1, %s3
  %s6 = scalar_select 0, %s5, %s3
  $region1: #{tpu_custom_call.1} parent=0
    #allocation2 [shape = 'u8[4096]{0}', space=vmem, size = 0x1000, scoped, tag = 'output window, operand 0, single buffered']
    #allocation3 [shape = 's32[1]{0}', space=sflag, size = 0x4, scoped, tag = 'scoped memory for tpu_custom_call.1']
    %7 = vsyncpa [#allocation3], 0
    // Predicated region
    $region2: #{tpu_custom_call.1} parent=1 // pred_check
      _
    $region3: #{tpu_custom_call.1} parent=1 // pred_check_branch
      %9 = sbr.rel (0) target = $region5
    $region4: #{tpu_custom_call.1} parent=1 // pred_region
      _
    $region5: #{tpu_custom_call.1} parent=1 // pred_fallthru
      _
    // Predicated region
    $region6: #{tpu_custom_call.1} parent=1 // pred_check
      _
    $region7: #{tpu_custom_call.1} parent=1 // pred_check_branch
      %11 = sbr.rel (0) target = $region9
    $region8: #{tpu_custom_call.1} parent=1 // pred_region
      _
    $region9: #{tpu_custom_call.1} parent=1 // pred_fallthru
      _
    %v12 = vld [vmem:[%s0] sm:$0xff]
    %v13 = vld [vmem:[%s1] sm:$0xff]
    %vm14 = vcmask 261120
    %v15 = vsel %vm14, %v12, -inf
    %16 = vmax.xlane.f32.xlu0 %v15
    %v17 = vpop.xlane.xlu0 %16
    %v18 = vsub.f32 %v12, %v17
    %v19 = vmul.f32 %v18, 1.442695
    %v20 = vpow.pop %v19
    %v21 = vsel %vm14, %v20, 0.0
    %22 = vadd.xlane.f32.xlu0 %v21
    %v23 = vpop.xlane.xlu0 %22
    %v24 = vlog2.pop %v23
    %v25 = vmul.f32 %v24, 0.6931472
    %v26 = vlaneseq
    %v27 = vand.u32 %v26, 127
    %28 = vset.pattern.permute.xlu0 0
    %29 = vperm.xlu0 %28, %v13
    %v30 = vpop.permute.xlu0 %29
    %vm31 = vcmp.eq.s32.totalorder %v27, %v30
    %v32 = vsel %vm31, %v18, 0.0
    %v33 = vsel %vm14, %v32, 0.0
    %34 = vadd.xlane.f32.xlu0 %v33
    %v35 = vpop.xlane.xlu0 %34
    %v36 = vsub.f32 %v35, %v25
    %v37 = vmul.f32 %v36, 1.442695
    %v38 = vpow.pop %v37
    %v39 = vsub.f32 1.0, %v38
    %v40 = vmul.f32 %v39, %v39
    %s41 = smul.u32 0, 8
    %v42 = vlaneseq
    %v43 = vshrl.u32 %v42, 7
    %v44 = vstv %s41
    %v45 = vadd.s32 %v44, %v43
    %vm46 = vcmp.lt.s32.totalorder %v45, 8
    %v47 = vmul.f32 %v40, %v36
    %v48 = vsel %vm46, %v47, 0.0
    %v49 = vrot.slane %v48, 4
    %v50 = vadd.f32 %v48, %v49
    %v51 = vrot.slane %v50, 2
    %v52 = vadd.f32 %v50, %v51
    %v53 = vrot.slane %v52, 1
    %v54 = vadd.f32 %v52, %v53
    %55 = vst [vmem:[#allocation2] sm:$0xff] %v54
    // Predicated region
    $region10: #{tpu_custom_call.1} parent=1 // pred_check
      _
    $region11: #{tpu_custom_call.1} parent=1 // pred_check_branch
      %57 = sbr.rel (0) target = $region13
    $region12: #{tpu_custom_call.1} parent=1 // pred_region
      %s59 = ssub.s32 128, 128
      %60 = vsyncadd [#allocation3], %s59
      %s62 = sshll.u32 [#allocation2], 4
      %s63 = int_to_ptr.vmem [resolvable:$true] %s62
      %65 = dma.vmem_to_hbm [thread:$0]  %s63, 128, %s2, [#allocation3]
    $region13: #{tpu_custom_call.1} parent=1 // pred_fallthru
      _
    // Predicated region
    $region14: #{tpu_custom_call.1} parent=1 // pred_check
      _
    $region15: #{tpu_custom_call.1} parent=1 // pred_check_branch
      %67 = sbr.rel (0) target = $region17
    $region16: #{tpu_custom_call.1} parent=1 // pred_region
      %68 = dma.done [#allocation3], 128
    $region17: #{tpu_custom_call.1} parent=1 // pred_fallthru
      _
    %69 = vsyncpa [#allocation3], 1

</llo_original>
